<compile_context>
chip_gen: v7x
topology: tpu7x:2x2x1
jax: 0.10.0
libtpu: 0.0.40
codegen_flags: <defaults>
</compile_context>

<pallas_src>
import functools

import jax
import jax.numpy as jnp
from jax.experimental import pallas as pl
from jax.experimental.pallas import tpu as pltpu


def _round_up(x, m):
    return (x + m - 1) // m * m


# ------------------------------ Pallas kernel -------------------------------

def _fused_dwconv_deconv_kernel(p_ref, w1_ref, b1_ref, w2_ref, b2_ref, o_ref):
    # p:  (TM, K1)       bf16 im2col patch row-tile          (K1 = k*k*c1)
    # w1: (K1, Cmid)     bf16 depthwise-as-dense weights, BN scale folded (Cmid = pad128(c1))
    # b1: (1,  Cmid)     f32  folded BN bias
    # w2: (Cmid, Nout)   bf16 deconv weights, layer-scale gamma folded    (Nout = pad128(c2*s*s))
    # b2: (1,  Nout)     f32  deconv bias * gamma
    # o:  (TM, Nout)     f32
    h = jnp.dot(p_ref[...], w1_ref[...], preferred_element_type=jnp.float32)
    h = jnp.maximum(h + b1_ref[...], 0.0)                  # ConvBnAct activation (ReLU)
    acc = jnp.dot(h.astype(w2_ref.dtype), w2_ref[...],
                  preferred_element_type=jnp.float32)
    o_ref[...] = (acc + b2_ref[...]).astype(o_ref.dtype)   # bias + gamma already folded


def fused_matmul_chain(patches, w1, b1, w2, b2, *, tm=512):
    """relu(patches @ w1 + b1) @ w2 + b2, tiled over rows on the MXU."""
    m, k1 = patches.shape
    c_mid = w1.shape[1]
    n_out = w2.shape[1]

    # Row-tile sizing: TM in the 256-512 range is safe for v7x's 64 MiB per-TC
    # VMEM; raise towards 1024-2048 on v6e/v5e (128 MiB) if desired.
    m_pad = _round_up(m, 16)
    tm = _round_up(min(tm, m_pad), 16)
    m_pad = _round_up(m, tm)
    if m_pad != m:
        patches = jnp.pad(patches, ((0, m_pad - m), (0, 0)))
    grid_m = m_pad // tm

    flops = 2 * m_pad * (k1 * c_mid + c_mid * n_out)
    bytes_accessed = (m_pad * k1 * patches.dtype.itemsize
                      + k1 * c_mid * w1.dtype.itemsize
                      + c_mid * n_out * w2.dtype.itemsize
                      + 4 * (c_mid + n_out)
                      + m_pad * n_out * 4)

    out = pl.pallas_call(
        _fused_dwconv_deconv_kernel,
        out_shape=jax.ShapeDtypeStruct((m_pad, n_out), jnp.float32),
        grid_spec=pltpu.PrefetchScalarGridSpec(
            num_scalar_prefetch=0,
            grid=(grid_m,),
            in_specs=[
                pl.BlockSpec((tm, k1), lambda i: (i, 0)),       # streamed row tiles
                pl.BlockSpec((k1, c_mid), lambda i: (0, 0)),    # resident weights
                pl.BlockSpec((1, c_mid), lambda i: (0, 0)),
                pl.BlockSpec((c_mid, n_out), lambda i: (0, 0)),
                pl.BlockSpec((1, n_out), lambda i: (0, 0)),
            ],
            out_specs=pl.BlockSpec((tm, n_out), lambda i: (i, 0)),
        ),
        compiler_params=pltpu.CompilerParams(
            dimension_semantics=("parallel",),        # megacore / 2-TC row split
            vmem_limit_bytes=32 * 1024 * 1024,        # explicit; plenty of headroom
        ),
        cost_estimate=pl.CostEstimate(
            flops=flops, transcendentals=0, bytes_accessed=bytes_accessed),
    )(patches, w1, b1, w2, b2)
    return out[:m]


# ------------------------------ module forward ------------------------------

def robust_conv2_forward(x_nchw, params, *, k=7, s=4, tm=512,
                         mxu_dtype=jnp.bfloat16):
    n, c1, h, w = x_nchw.shape
    p = k // 2                                   # autopad(k, None)
    c2 = params['w_dc'].shape[1]

    x = jnp.transpose(x_nchw, (0, 2, 3, 1))      # NCHW -> NHWC

    # --- stride-s im2col patch gather (column order (dy, dx, cin)) ---
    ho = (h + 2 * p - k) // s + 1
    wo = (w + 2 * p - k) // s + 1
    xp = jnp.pad(x, ((0, 0), (p, p), (p, p), (0, 0)))
    cols = []
    for dy in range(k):
        for dx in range(k):
            cols.append(xp[:, dy:dy + s * ho:s, dx:dx + s * wo:s, :])
    patches = jnp.concatenate(cols, axis=-1).reshape(n * ho * wo, k * k * c1)

    # --- depthwise conv as block-diagonal dense GEMM, eval-mode BN folded ---
    scale = params['gamma'] / jnp.sqrt(params['var'] + params['eps'])
    bias1 = params['beta'] - params['mean'] * scale
    w_taps = jnp.transpose(params['w_dw'][:, 0], (1, 2, 0))            # (k, k, c1)
    eye = jnp.eye(c1, dtype=jnp.float32)
    w1 = (w_taps[..., None] * eye[None, None]) * scale[None, None, None, :]
    w1 = w1.reshape(k * k * c1, c1)                                    # rows: (dy, dx, cin)

    # --- ConvTranspose2d(kernel==stride, padding=0): per-pixel GEMM to c2*s*s
    #     columns, with the deconv bias and layer-scale gamma folded in ---
    ls = params['ls_gamma']
    w2 = (params['w_dc'] * ls[None, :, None, None]).reshape(c1, c2 * s * s)
    b2 = jnp.repeat(params['b_dc'] * ls, s * s)

    # --- lane-dense padding of channel dims (multiples of 128) ---
    c_mid = _round_up(c1, 128)
    n_cols = c2 * s * s
    n_out = _round_up(n_cols, 128)
    w1 = jnp.pad(w1, ((0, 0), (0, c_mid - c1)))
    b1 = jnp.pad(bias1, (0, c_mid - c1)).reshape(1, c_mid)
    w2 = jnp.pad(w2, ((0, c_mid - c1), (0, n_out - n_cols)))
    b2 = jnp.pad(b2, (0, n_out - n_cols)).reshape(1, n_out)

    out = fused_matmul_chain(
        patches.astype(mxu_dtype), w1.astype(mxu_dtype), b1,
        w2.astype(mxu_dtype), b2, tm=tm)

    # depth-to-space of the deconv columns: (co, i, j) -> spatial (s*ho, s*wo, co)
    out = out[:, :n_cols].reshape(n, ho, wo, c2, s, s)
    out = jnp.transpose(out, (0, 1, 4, 2, 5, 3)).reshape(n, ho * s, wo * s, c2)
    return jnp.transpose(out, (0, 3, 1, 2))      # NHWC -> NCHW


# --------------------------- synthetic parameters ----------------------------

def init_params(key, c1, c2, k=7, s=4, eps=1e-5, layer_scale_init_value=1e-6):
    k_dw, k_g, k_b, k_m, k_v, k_dc, k_db = jax.random.split(key, 7)
    w_dw = 0.1 * jax.random.normal(k_dw, (c1, 1, k, k), jnp.float32)    # depthwise conv
    gamma_bn = 1.0 + 0.1 * jax.random.normal(k_g, (c1,), jnp.float32)   # BN (eval mode)
    beta_bn = 0.05 * jax.random.normal(k_b, (c1,), jnp.float32)
    mean_bn = 0.1 * jax.random.normal(k_m, (c1,), jnp.float32)
    var_bn = 0.5 + 0.5 * jnp.abs(jax.random.normal(k_v, (c1,), jnp.float32))
    w_dc = 0.1 * jax.random.normal(k_dc, (c1, c2, s, s), jnp.float32)   # ConvTranspose2d
    b_dc = 0.05 * jax.random.normal(k_db, (c2,), jnp.float32)
    ls_gamma = layer_scale_init_value * jnp.ones((c2,), jnp.float32)    # layer scale
    return dict(w_dw=w_dw, gamma=gamma_bn, beta=beta_bn, mean=mean_bn,
                var=var_bn, eps=eps, w_dc=w_dc, b_dc=b_dc, ls_gamma=ls_gamma)


# ---------------------------- pure-JAX reference -----------------------------

def robust_conv2_reference(x_nchw, params, *, k=7, s=4):
    n, c1, h, w = x_nchw.shape
    p = k // 2
    c2 = params['w_dc'].shape[1]
    x = jnp.transpose(x_nchw, (0, 2, 3, 1))

    # depthwise conv (groups=c1) + BN + ReLU
    w_hwio = jnp.transpose(params['w_dw'], (2, 3, 1, 0))       # (k, k, 1, c1)
    y = jax.lax.conv_general_dilated(
        x, w_hwio, (s, s), [(p, p), (p, p)],
        dimension_numbers=('NHWC', 'HWIO', 'NHWC'),
        feature_group_count=c1)
    scale = params['gamma'] / jnp.sqrt(params['var'] + params['eps'])
    bias1 = params['beta'] - params['mean'] * scale
    y = jax.nn.relu(y * scale + bias1)

    # ConvTranspose2d(kernel==stride, padding=0) == per-pixel GEMM + depth-to-space
    wd = params['w_dc']
    z = jnp.einsum('nhwc,cdij->nhwdij', y, wd) \
        + params['b_dc'][None, None, None, :, None, None]
    ho, wo = y.shape[1], y.shape[2]
    z = jnp.transpose(z, (0, 1, 4, 2, 5, 3)).reshape(n, ho * s, wo * s, c2)
    z = z * params['ls_gamma'][None, None, None, :]
    return jnp.transpose(z, (0, 3, 1, 2))


# ----------------------------------- main ------------------------------------

if __name__ == "__main__":
    key = jax.random.PRNGKey(0)
    kx, kp = jax.random.split(key)

    N, C1, H, W = 2, 4, 16, 16
    C2, K, S = 8, 7, 4

    x = jax.random.normal(kx, (N, C1, H, W), jnp.float32)
    params = init_params(kp, C1, C2, k=K, s=S)

    fwd = jax.jit(functools.partial(robust_conv2_forward, k=K, s=S))
    y = fwd(x, params)
    jax.block_until_ready(y)

    y_ref = robust_conv2_reference(x, params, k=K, s=S)
    ho = (H + 2 * (K // 2) - K) // S + 1
    wo = (W + 2 * (K // 2) - K) // S + 1
    assert y.shape == (N, C2, ho * S, wo * S), y.shape
    # bf16 MXU inputs with f32 accumulation -> slightly loosened tolerance.
    assert jnp.allclose(y, y_ref, rtol=5e-2, atol=3e-8), (
        "mismatch vs JAX reference: max abs diff "
        f"{float(jnp.max(jnp.abs(y - y_ref)))}")

    print("KERNEL_OK")
</pallas_src>

<mosaic_0001>
module attributes {stable_mosaic.version = 11 : i64} {
  func.func @_fused_dwconv_deconv_kernel(%arg0: i32, %arg1: memref<32x196xbf16, #tpu.memory_space<vmem>>, %arg2: memref<196x128xbf16, #tpu.memory_space<vmem>>, %arg3: memref<1x128xf32, #tpu.memory_space<vmem>>, %arg4: memref<128x128xbf16, #tpu.memory_space<vmem>>, %arg5: memref<1x128xf32, #tpu.memory_space<vmem>>, %arg6: memref<32x128xf32, #tpu.memory_space<vmem>>) attributes {dimension_semantics = [#tpu.dimension_semantics<parallel>], iteration_bounds = array<i64: 1>, scalar_prefetch = 0 : i64, scratch_operands = 0 : i64, tpu.core_type = #tpu.core_type<tc>, window_params = [{transform_indices = @transform_0, window_bounds = array<i64: 32, 196>}, {pipeline_mode = #tpu.pipeline_mode<synchronous>, transform_indices = @transform_1, window_bounds = array<i64: 196, 128>}, {pipeline_mode = #tpu.pipeline_mode<synchronous>, transform_indices = @transform_2, window_bounds = array<i64: 1, 128>}, {pipeline_mode = #tpu.pipeline_mode<synchronous>, transform_indices = @transform_3, window_bounds = array<i64: 128, 128>}, {pipeline_mode = #tpu.pipeline_mode<synchronous>, transform_indices = @transform_4, window_bounds = array<i64: 1, 128>}, {transform_indices = @transform_5, window_bounds = array<i64: 32, 128>}]} {
    %c0 = arith.constant 0 : index
    %c0_0 = arith.constant 0 : index
    %0 = vector.load %arg1[%c0, %c0_0] : memref<32x196xbf16, #tpu.memory_space<vmem>>, vector<32x196xbf16>
    %c0_1 = arith.constant 0 : index
    %c0_2 = arith.constant 0 : index
    %1 = vector.load %arg2[%c0_1, %c0_2] : memref<196x128xbf16, #tpu.memory_space<vmem>>, vector<196x128xbf16>
    %cst = arith.constant dense<0.000000e+00> : vector<32x128xf32>
    %2 = tpu.matmul %0, %1, %cst {dimension_numbers = #tpu.dot_dimension_numbers<[1], [0], [0], [1], [0, 0, 1, 1], [], []>} : vector<32x196xbf16>, vector<196x128xbf16>, vector<32x128xf32> -> vector<32x128xf32>
    %c0_3 = arith.constant 0 : index
    %c0_4 = arith.constant 0 : index
    %3 = vector.load %arg3[%c0_3, %c0_4] : memref<1x128xf32, #tpu.memory_space<vmem>>, vector<1x128xf32>
    %4 = vector.broadcast %3 : vector<1x128xf32> to vector<32x128xf32>
    %5 = arith.addf %2, %4 : vector<32x128xf32>
    %cst_5 = arith.constant 0.000000e+00 : f32
    %6 = vector.broadcast %cst_5 : f32 to vector<32x128xf32>
    %7 = arith.maximumf %5, %6 : vector<32x128xf32>
    %8 = arith.truncf %7 : vector<32x128xf32> to vector<32x128xbf16>
    %c0_6 = arith.constant 0 : index
    %c0_7 = arith.constant 0 : index
    %9 = vector.load %arg4[%c0_6, %c0_7] : memref<128x128xbf16, #tpu.memory_space<vmem>>, vector<128x128xbf16>
    %cst_8 = arith.constant dense<0.000000e+00> : vector<32x128xf32>
    %10 = tpu.matmul %8, %9, %cst_8 {dimension_numbers = #tpu.dot_dimension_numbers<[1], [0], [0], [1], [0, 0, 1, 1], [], []>} : vector<32x128xbf16>, vector<128x128xbf16>, vector<32x128xf32> -> vector<32x128xf32>
    %c0_9 = arith.constant 0 : index
    %c0_10 = arith.constant 0 : index
    %11 = vector.load %arg5[%c0_9, %c0_10] : memref<1x128xf32, #tpu.memory_space<vmem>>, vector<1x128xf32>
    %12 = vector.broadcast %11 : vector<1x128xf32> to vector<32x128xf32>
    %13 = arith.addf %10, %12 : vector<32x128xf32>
    %c0_11 = arith.constant 0 : index
    %c0_12 = arith.constant 0 : index
    %14 = vector.load %arg6[%c0_11, %c0_12] : memref<32x128xf32, #tpu.memory_space<vmem>>, vector<32x128xf32>
    tpu.vector_store %arg6[%c0_11, %c0_12], %13 {strides = array<i32>} : memref<32x128xf32, #tpu.memory_space<vmem>>, vector<32x128xf32>,
    return
  }
  func.func @transform_0(%arg0: i32) -> (i32, i32) {
    %c0_i32 = arith.constant 0 : i32
    %c0_i32_0 = arith.constant 0 : i32
    return %arg0, %c0_i32 : i32, i32
  }
  func.func @transform_1(%arg0: i32) -> (i32, i32) {
    %c0_i32 = arith.constant 0 : i32
    %c0_i32_0 = arith.constant 0 : i32
    %c0_i32_1 = arith.constant 0 : i32
    return %c0_i32, %c0_i32_0 : i32, i32
  }
  func.func @transform_2(%arg0: i32) -> (i32, i32) {
    %c0_i32 = arith.constant 0 : i32
    %c0_i32_0 = arith.constant 0 : i32
    %c0_i32_1 = arith.constant 0 : i32
    return %c0_i32, %c0_i32_0 : i32, i32
  }
  func.func @transform_3(%arg0: i32) -> (i32, i32) {
    %c0_i32 = arith.constant 0 : i32
    %c0_i32_0 = arith.constant 0 : i32
    %c0_i32_1 = arith.constant 0 : i32
    return %c0_i32, %c0_i32_0 : i32, i32
  }
  func.func @transform_4(%arg0: i32) -> (i32, i32) {
    %c0_i32 = arith.constant 0 : i32
    %c0_i32_0 = arith.constant 0 : i32
    %c0_i32_1 = arith.constant 0 : i32
    return %c0_i32, %c0_i32_0 : i32, i32
  }
  func.func @transform_5(%arg0: i32) -> (i32, i32) {
    %c0_i32 = arith.constant 0 : i32
    %c0_i32_0 = arith.constant 0 : i32
    return %arg0, %c0_i32 : i32, i32
  }
}

</mosaic_0001>

<llo_original>
// kernel: mul.33
$region0: #{mul.33}
  #allocation2 [shape = 's32[1]{0}', space=sflag, size = 0x4, scoped, tag = 'scoped memory for mul.33']
  %s0 = inlined_call_operand.hbm [shape: f32[8], index: 0, kind: input, shape index: {}]
  %s1 = inlined_call_operand.vmem [shape: f32[8], index: 1, kind: input, shape index: {}]
  %s2 = inlined_call_operand.vmem [shape: f32[8], index: 2, kind: output, shape index: {}]
  $region1: #{mul.33} parent=0
    #allocation0 [shape = 'u8[512]{0}', space=vmem, size = 0x400, scoped, tag = 'operand span for operand 0']
    #allocation1 [shape = 's32[1]{0}', space=sflag, size = 0x4, scoped, tag = 'scoped memory for mul.33']
    %3 = vsyncpa [#allocation1], 0
    %s5 = ssub.s32 16, 16
    %6 = vsyncadd [#allocation1], %s5
    %s8 = sshll.u32 [#allocation0], 4
    %s9 = int_to_ptr.vmem [resolvable:$true] %s8
    %11 = dma.hbm_to_vmem [thread:$0]  %s0, 16, %s9, [#allocation1]
    %12 = dma.done [#allocation1], 16
    %v13 = vld [vmem:[#allocation0] sm:$0x1]
    %v14 = vld [vmem:[%s1] sm:$0x1]
    %15 = xla_tuple %v13, %v14
    %16 = xla_tuple %15
    %v17 = vmul.f32 %v13, %v14
    %18 = xla_tuple %v17
    %19 = vst [vmem:[%s2] sm:$0x1] %v17
    %20 = vsyncpa [#allocation1], 1

// kernel: robust_conv2_forward.1
$region0: #{robust_conv2_forward.1}
  #allocation0 [shape = 'u32[]', space=smem, size = 0x4, offset = 0x4, fixed_abs, tag = 'smem constant byte address 0x4 - core index']
  #allocation1 [shape = 'u32[144,128]{1,0:T(1,128)}', space=vmem, size = 0x12000, scoped, tag = 'internal scratch']
  %s0 = inlined_call_operand.vmem [shape: bf16[32,196], index: 0, kind: input, shape index: {}]
  %s1 = inlined_call_operand.vmem [shape: bf16[196,128], index: 1, kind: input, shape index: {}]
  %s2 = inlined_call_operand.vmem [shape: f32[1,128], index: 2, kind: input, shape index: {}]
  %s3 = inlined_call_operand.vmem [shape: bf16[128,128], index: 3, kind: input, shape index: {}]
  %s4 = inlined_call_operand.vmem [shape: f32[1,128], index: 4, kind: input, shape index: {}]
  %s5 = inlined_call_operand.vmem [shape: f32[32,128], index: 5, kind: output, shape index: {}]
  %s6 = sld [smem:[#allocation0]]
  $region30: #{robust_conv2_forward.1} parent=0
    _
  %s8 = ssub.s32 1, %s6
  %s9 = scalar_select 0, %s8, %s6
  // Predicated region
  $region2: #{robust_conv2_forward.1} parent=0 // pred_check
    _
  $region3: #{robust_conv2_forward.1} parent=0 // pred_check_branch
    %11 = sbr.rel (0) target = $region5
  $region4: #{robust_conv2_forward.1} parent=0 // pred_region
    _
  $region5: #{robust_conv2_forward.1} parent=0 // pred_fallthru
    _
  // Predicated region
  $region6: #{robust_conv2_forward.1} parent=0 // pred_check
    _
  $region7: #{robust_conv2_forward.1} parent=0 // pred_check_branch
    %13 = sbr.rel (0) target = $region9
  $region8: #{robust_conv2_forward.1} parent=0 // pred_region
    _
  $region9: #{robust_conv2_forward.1} parent=0 // pred_fallthru
    _
  // Predicated region
  $region10: #{robust_conv2_forward.1} parent=0 // pred_check
    _
  $region11: #{robust_conv2_forward.1} parent=0 // pred_check_branch
    %15 = sbr.rel (0) target = $region13
  $region12: #{robust_conv2_forward.1} parent=0 // pred_region
    _
  $region13: #{robust_conv2_forward.1} parent=0 // pred_fallthru
    _
  // Predicated region
  $region14: #{robust_conv2_forward.1} parent=0 // pred_check
    _
  $region15: #{robust_conv2_forward.1} parent=0 // pred_check_branch
    %17 = sbr.rel (0) target = $region17
  $region16: #{robust_conv2_forward.1} parent=0 // pred_region
    _
  $region17: #{robust_conv2_forward.1} parent=0 // pred_fallthru
    _
  // Predicated region
  $region18: #{robust_conv2_forward.1} parent=0 // pred_check
    _
  $region19: #{robust_conv2_forward.1} parent=0 // pred_check_branch
    %19 = sbr.rel (0) target = $region21
  $region20: #{robust_conv2_forward.1} parent=0 // pred_region
    _
  $region21: #{robust_conv2_forward.1} parent=0 // pred_fallthru
    _
  %v21 = vld [vmem:[%s0] sm:$0xff]
  %v22 = vld [vmem:[%s0 + $0x8] sm:$0xff]
  %v23 = vld [vmem:[%s0 + $0x10] sm:$0xff]
  %v24 = vld [vmem:[%s0 + $0x18] sm:$0xff]
  %v25 = vld [vmem:[%s1] sm:$0xf]
  %v26 = vld [vmem:[%s1 + $0x4] sm:$0xf]
  %v27 = vld [vmem:[%s1 + $0x8] sm:$0xf]
  %v28 = vld [vmem:[%s1 + $0xc] sm:$0xf]
  %v29 = vld [vmem:[%s1 + $0x10] sm:$0xf]
  %v30 = vld [vmem:[%s1 + $0x14] sm:$0xf]
  %v31 = vld [vmem:[%s1 + $0x18] sm:$0xf]
  %v32 = vld [vmem:[%s1 + $0x1c] sm:$0xf]
  %v33 = vld [vmem:[%s1 + $0x20] sm:$0xf]
  %v34 = vld [vmem:[%s1 + $0x24] sm:$0xf]
  %v35 = vld [vmem:[%s1 + $0x28] sm:$0xf]
  %v36 = vld [vmem:[%s1 + $0x2c] sm:$0xf]
  %v37 = vld [vmem:[%s1 + $0x30] sm:$0xf]
  %v38 = vld [vmem:[%s1 + $0x34] sm:$0xf]
  %v39 = vld [vmem:[%s1 + $0x38] sm:$0xf]
  %v40 = vld [vmem:[%s1 + $0x3c] sm:$0xf]
  %v41 = vld [vmem:[%s1 + $0x40] sm:$0xf]
  %v42 = vld [vmem:[%s1 + $0x44] sm:$0xf]
  %v43 = vld [vmem:[%s1 + $0x48] sm:$0xf]
  %v44 = vld [vmem:[%s1 + $0x4c] sm:$0xf]
  %v45 = vld [vmem:[%s1 + $0x50] sm:$0xf]
  %v46 = vld [vmem:[%s1 + $0x54] sm:$0xf]
  %v47 = vld [vmem:[%s1 + $0x58] sm:$0xf]
  %v48 = vld [vmem:[%s1 + $0x5c] sm:$0xf]
  %v49 = vld [vmem:[%s1 + $0x60] sm:$0x3]
  %v50 = vld [vmem:[%s2] sm:$0x1]
  %v52 = vlaneseq
  %v53 = vshrl.u32 %v52, 7
  %v54 = vsub.s32 0, %v53
  %v55 = vrot.slane %v50, %v54
  %v61 = vunpack.c.l.b16 %v21
  %v62 = vunpack.c.h.b16 %v21
  %v63 = vunpack.c.l.b16 %v22
  %v64 = vunpack.c.h.b16 %v22
  %v65 = vunpack.c.l.b16 %v23
  %v66 = vunpack.c.h.b16 %v23
  %v67 = vunpack.c.l.b16 %v24
  %v68 = vunpack.c.h.b16 %v24
  %v69 = vpack.c.b16 %v63, %v61
  %v70 = vpack.c.b16 %v64, %v62
  %v71 = vpack.c.b16 %v67, %v65
  %v72 = vpack.c.b16 %v68, %v66
  %v100 = vunpack.c.l.b16 %v25
  %v101 = vunpack.c.l.b16 %v26
  %v102 = vunpack.c.l.b16 %v27
  %v103 = vunpack.c.l.b16 %v28
  %v104 = vunpack.c.l.b16 %v29
  %v105 = vunpack.c.l.b16 %v30
  %v106 = vunpack.c.l.b16 %v31
  %v107 = vunpack.c.l.b16 %v32
  %v108 = vunpack.c.l.b16 %v33
  %v109 = vunpack.c.l.b16 %v34
  %v110 = vunpack.c.l.b16 %v35
  %v111 = vunpack.c.l.b16 %v36
  %v112 = vunpack.c.l.b16 %v37
  %v113 = vunpack.c.l.b16 %v38
  %v114 = vunpack.c.l.b16 %v39
  %v115 = vunpack.c.l.b16 %v40
  %v116 = vunpack.c.l.b16 %v41
  %v117 = vunpack.c.l.b16 %v42
  %v118 = vunpack.c.l.b16 %v43
  %v119 = vunpack.c.l.b16 %v44
  %v120 = vunpack.c.l.b16 %v45
  %v121 = vunpack.c.l.b16 %v46
  %v122 = vunpack.c.l.b16 %v47
  %v123 = vunpack.c.l.b16 %v48
  %v124 = vunpack.c.l.b16 %v49
  %v125 = vpack.c.b16 %v101, %v100
  %v126 = vpack.c.b16 %v103, %v102
  %v127 = vpack.c.b16 %v105, %v104
  %v128 = vpack.c.b16 %v107, %v106
  %v129 = vpack.c.b16 %v109, %v108
  %v130 = vpack.c.b16 %v111, %v110
  %v131 = vpack.c.b16 %v113, %v112
  %v132 = vpack.c.b16 %v115, %v114
  %v133 = vpack.c.b16 %v117, %v116
  %v134 = vpack.c.b16 %v119, %v118
  %v135 = vpack.c.b16 %v121, %v120
  %v136 = vpack.c.b16 %v123, %v122
  %v137 = vpack.c.b16 %v124, %v124
  %vm150 = vcmask 556032
  %v152 = vsel %vm150, %v70, 0
  %v155 = vsel %vm150, %v72, 0
  %vm157 = vcmask 1041408
  %v159 = vsel %vm157, %v137, 0
  %161 = vmatprep.subr.bf16.mxu0 0
  %162 = vmatpush1.bf16.msra.mxu0 %v125
  %163 = vmatprep.subr.bf16.mxu0 0
  %164 = vmatpush1.bf16.msra.mxu0 %v126
  %165 = vmatprep.subr.bf16.mxu0 0
  %166 = vmatpush1.bf16.msra.mxu0 %v127
  %167 = vmatprep.subr.bf16.mxu0 0
  %168 = vmatpush1.bf16.msra.mxu0 %v128
  %169 = vmatprep.subr.bf16.mxu0 0
  %170 = vmatpush1.bf16.msra.mxu0 %v129
  %171 = vmatprep.subr.bf16.mxu0 0
  %172 = vmatpush1.bf16.msra.mxu0 %v130
  %173 = vmatprep.subr.bf16.mxu0 0
  %174 = vmatpush1.bf16.msra.mxu0 %v131
  %175 = vmatprep.subr.bf16.mxu0 0
  %176 = vmatpush1.bf16.msra.mxu0 %v132
  %177 = vmatprep.subr.bf16.mxu0 0
  %178 = vmatpush1.bf16.msra.mxu0 %v133
  %179 = vmatprep.subr.bf16.mxu0 0
  %180 = vmatpush1.bf16.msra.mxu0 %v134
  %181 = vmatprep.subr.bf16.mxu0 0
  %182 = vmatpush1.bf16.msra.mxu0 %v135
  %183 = vmatprep.subr.bf16.mxu0 0
  %184 = vmatpush1.bf16.msra.mxu0 %v136
  %185 = vmatprep.subr.bf16.mxu0 0
  %186 = vmatpush1.bf16.msra.mxu0 %v159
  %187 = vmatprep.subr.bf16.mxu0 0
  %188 = vmatpush1.bf16.msra.mxu0 0
  %189 = vmatprep.subr.bf16.mxu0 0
  %190 = vmatpush1.bf16.msra.mxu0 0
  %191 = vmatprep.subr.bf16.mxu0 0
  %192 = vmatpush1.bf16.msra.mxu0 0
  %193 = vmatprep.mubr.bf16.mxu0 %v152
  %194 = vmatmul.mubr.bf16.gmra.mrb[0].mxu0 %v69
  %v195 = vpop.f32.mrb[0].mxu0
  %v196 = vadd.f32 %v55, %v195
  %v197 = vpop.f32.mrb[0].mxu0
  %v198 = vpop.f32.mrb[0].mxu0
  %v199 = vadd.f32 %v55, %v198
  %v200 = vpop.f32.mrb[0].mxu0
  %201 = vmatprep.mubr.bf16.mxu0 %v155
  %202 = vmatmul.mubr.bf16.gmra.mrb[0].mxu0 %v71
  %v203 = vpop.f32.mrb[0].mxu0
  %v204 = vadd.f32 %v55, %v203
  %v205 = vpop.f32.mrb[0].mxu0
  %v206 = vpop.f32.mrb[0].mxu0
  %v207 = vadd.f32 %v55, %v206
  %v208 = vpop.f32.mrb[0].mxu0
  %209 = vdwg.mxu0
  %v210 = vmax.f32 %v196, 0.0
  %v211 = vmax.f32 %v199, 0.0
  %v212 = vmax.f32 %v204, 0.0
  %v213 = vmax.f32 %v207, 0.0
  %v214 = vpack.c.bf16 %v211, %v210
  %v215 = vpack.c.bf16 %v213, %v212
  %v216 = vld [vmem:[%s3] sm:$0xf]
  %v217 = vld [vmem:[%s3 + $0x4] sm:$0xf]
  %v218 = vld [vmem:[%s3 + $0x8] sm:$0xf]
  %v219 = vld [vmem:[%s3 + $0xc] sm:$0xf]
  %v220 = vld [vmem:[%s3 + $0x10] sm:$0xf]
  %v221 = vld [vmem:[%s3 + $0x14] sm:$0xf]
  %v222 = vld [vmem:[%s3 + $0x18] sm:$0xf]
  %v223 = vld [vmem:[%s3 + $0x1c] sm:$0xf]
  %v224 = vld [vmem:[%s3 + $0x20] sm:$0xf]
  %v225 = vld [vmem:[%s3 + $0x24] sm:$0xf]
  %v226 = vld [vmem:[%s3 + $0x28] sm:$0xf]
  %v227 = vld [vmem:[%s3 + $0x2c] sm:$0xf]
  %v228 = vld [vmem:[%s3 + $0x30] sm:$0xf]
  %v229 = vld [vmem:[%s3 + $0x34] sm:$0xf]
  %v230 = vld [vmem:[%s3 + $0x38] sm:$0xf]
  %v231 = vld [vmem:[%s3 + $0x3c] sm:$0xf]
  %v232 = vld [vmem:[%s4] sm:$0x1]
  %v234 = vlaneseq
  %v235 = vshrl.u32 %v234, 7
  %v236 = vsub.s32 0, %v235
  %v237 = vrot.slane %v232, %v236
  %v255 = vunpack.c.l.b16 %v216
  %v256 = vunpack.c.l.b16 %v217
  %v257 = vunpack.c.l.b16 %v218
  %v258 = vunpack.c.l.b16 %v219
  %v259 = vunpack.c.l.b16 %v220
  %v260 = vunpack.c.l.b16 %v221
  %v261 = vunpack.c.l.b16 %v222
  %v262 = vunpack.c.l.b16 %v223
  %v263 = vunpack.c.l.b16 %v224
  %v264 = vunpack.c.l.b16 %v225
  %v265 = vunpack.c.l.b16 %v226
  %v266 = vunpack.c.l.b16 %v227
  %v267 = vunpack.c.l.b16 %v228
  %v268 = vunpack.c.l.b16 %v229
  %v269 = vunpack.c.l.b16 %v230
  %v270 = vunpack.c.l.b16 %v231
  %v271 = vpack.c.b16 %v256, %v255
  %v272 = vpack.c.b16 %v258, %v257
  %v273 = vpack.c.b16 %v260, %v259
  %v274 = vpack.c.b16 %v262, %v261
  %v275 = vpack.c.b16 %v264, %v263
  %v276 = vpack.c.b16 %v266, %v265
  %v277 = vpack.c.b16 %v268, %v267
  %v278 = vpack.c.b16 %v270, %v269
  %287 = vmatprep.subr.bf16.mxu0 0
  %288 = vmatpush1.bf16.msra.mxu0 %v271
  %289 = vmatprep.subr.bf16.mxu0 0
  %290 = vmatpush1.bf16.msra.mxu0 %v272
  %291 = vmatprep.subr.bf16.mxu0 0
  %292 = vmatpush1.bf16.msra.mxu0 %v273
  %293 = vmatprep.subr.bf16.mxu0 0
  %294 = vmatpush1.bf16.msra.mxu0 %v274
  %295 = vmatprep.subr.bf16.mxu0 0
  %296 = vmatpush1.bf16.msra.mxu0 %v275
  %297 = vmatprep.subr.bf16.mxu0 0
  %298 = vmatpush1.bf16.msra.mxu0 %v276
  %299 = vmatprep.subr.bf16.mxu0 0
  %300 = vmatpush1.bf16.msra.mxu0 %v277
  %301 = vmatprep.subr.bf16.mxu0 0
  %302 = vmatpush1.bf16.msra.mxu0 %v278
  %303 = vmatprep.subr.bf16.mxu0 0
  %304 = vmatpush1.bf16.msra.mxu0 0
  %305 = vmatprep.subr.bf16.mxu0 0
  %306 = vmatpush1.bf16.msra.mxu0 0
  %307 = vmatprep.subr.bf16.mxu0 0
  %308 = vmatpush1.bf16.msra.mxu0 0
  %309 = vmatprep.subr.bf16.mxu0 0
  %310 = vmatpush1.bf16.msra.mxu0 0
  %311 = vmatprep.subr.bf16.mxu0 0
  %312 = vmatpush1.bf16.msra.mxu0 0
  %313 = vmatprep.subr.bf16.mxu0 0
  %314 = vmatpush1.bf16.msra.mxu0 0
  %315 = vmatprep.subr.bf16.mxu0 0
  %316 = vmatpush1.bf16.msra.mxu0 0
  %317 = vmatprep.subr.bf16.mxu0 0
  %318 = vmatpush1.bf16.msra.mxu0 0
  %319 = vmatprep.mubr.bf16.mxu0 0
  %320 = vmatmul.mubr.bf16.gmra.mrb[0].mxu0 %v214
  %v321 = vpop.f32.mrb[0].mxu0
  %v322 = vadd.f32 %v237, %v321
  %v323 = vpop.f32.mrb[0].mxu0
  %v324 = vpop.f32.mrb[0].mxu0
  %v325 = vadd.f32 %v237, %v324
  %v326 = vpop.f32.mrb[0].mxu0
  %327 = vmatprep.mubr.bf16.mxu0 0
  %328 = vmatmul.mubr.bf16.gmra.mrb[0].mxu0 %v215
  %v329 = vpop.f32.mrb[0].mxu0
  %v330 = vadd.f32 %v237, %v329
  %v331 = vpop.f32.mrb[0].mxu0
  %v332 = vpop.f32.mrb[0].mxu0
  %v333 = vadd.f32 %v237, %v332
  %v334 = vpop.f32.mrb[0].mxu0
  %335 = vdwg.mxu0
  %336 = vst [vmem:[%s5] sm:$0xff] %v322
  %337 = vst [vmem:[%s5 + $0x8] sm:$0xff] %v325
  %338 = vst [vmem:[%s5 + $0x10] sm:$0xff] %v330
  %339 = vst [vmem:[%s5 + $0x18] sm:$0xff] %v333
  // Predicated region
  $region22: #{robust_conv2_forward.1} parent=0 // pred_check
    _
  $region23: #{robust_conv2_forward.1} parent=0 // pred_check_branch
    %341 = sbr.rel (0) target = $region25
  $region24: #{robust_conv2_forward.1} parent=0 // pred_region
    _
  $region25: #{robust_conv2_forward.1} parent=0 // pred_fallthru
    _
  // Predicated region
  $region26: #{robust_conv2_forward.1} parent=0 // pred_check
    _
  $region27: #{robust_conv2_forward.1} parent=0 // pred_check_branch
    %343 = sbr.rel (0) target = $region29
  $region28: #{robust_conv2_forward.1} parent=0 // pred_region
    _
  $region29: #{robust_conv2_forward.1} parent=0 // pred_fallthru
    _

</llo_original>
